<compile_context>
chip_gen: v5e
topology: v5e:2x2
jax: 0.10.0
libtpu: 0.0.40
codegen_flags: <defaults>
</compile_context>

<pallas_src>
import jax
import jax.numpy as jnp
from jax.experimental import pallas as pl
from jax.experimental.pallas import tpu as pltpu


def _identity_copy_kernel(x_ref, o_ref):
    # Pure pass-through: BaseModel defines no compute.
    o_ref[...] = x_ref[...]


def _pick_row_tile(rows: int, row_bytes: int, target_tile_bytes: int = 4 << 20) -> int:
    """Largest multiple-of-8 row count whose (rows x full-width) tile fits the target.

    Keeps the tile <= ~4 MiB so input+output double-buffering (~4x tile bytes resident)
    stays comfortably under the 32 MiB scoped-VMEM limit on every generation (incl. v7x).
    """
    if rows <= 8:
        return rows  # full-array block is always legal
    rt = max(8, (target_tile_bytes // max(row_bytes, 1)) // 8 * 8)
    return min(rows, rt)


def base_model_forward(x):
    """Pallas 'forward' for BaseModel: identity over the batch tensor.

    x: (N, C, H, W) float32, NCHW layout (PyTorch convention).
    Returns the same tensor, produced by a pipelined Pallas TPU copy kernel.
    """
    n, c, h, w = x.shape
    rows, cols = n * c, h * w  # lane-dense: last dim = H*W maps onto full 128-lane vregs
    x2d = x.reshape(rows, cols)

    row_tile = _pick_row_tile(rows, cols * x2d.dtype.itemsize)
    grid = (pl.cdiv(rows, row_tile),)

    out2d = pl.pallas_call(
        _identity_copy_kernel,
        out_shape=jax.ShapeDtypeStruct((rows, cols), x2d.dtype),
        grid=grid,
        in_specs=[pl.BlockSpec((row_tile, cols), lambda i: (i, 0))],
        out_specs=pl.BlockSpec((row_tile, cols), lambda i: (i, 0)),
        input_output_aliases={0: 0},
        compiler_params=pltpu.CompilerParams(
            dimension_semantics=("parallel",),
            vmem_limit_bytes=32 * 1024 * 1024,
        ),
        cost_estimate=pl.CostEstimate(
            flops=0,
            transcendentals=0,
            bytes_accessed=2 * x.size * x.dtype.itemsize,
        ),
    )(x2d)

    return out2d.reshape(n, c, h, w)


if __name__ == "__main__":
    key = jax.random.PRNGKey(0)
    # Small NCHW batch consistent with a generic model input.
    x = jax.random.normal(key, (2, 4, 16, 16), dtype=jnp.float32)

    # Snapshot to host before calling (output may alias the input buffer).
    expected = jax.device_get(x)

    y = base_model_forward(x)
    jax.block_until_ready(y)

    # Sanity check: identity semantics (BaseModel has no parameters / compute).
    assert y.shape == x.shape
    assert jnp.allclose(jax.device_get(y), expected)

    print("KERNEL_OK")
</pallas_src>

<mosaic_0001>
module attributes {stable_mosaic.version = 11 : i64} {
  func.func @_identity_copy_kernel(%arg0: i32, %arg1: memref<8x256xf32, #tpu.memory_space<vmem>>, %arg2: memref<8x256xf32, #tpu.memory_space<vmem>>) attributes {dimension_semantics = [#tpu.dimension_semantics<parallel>], iteration_bounds = array<i64: 1>, scalar_prefetch = 0 : i64, scratch_operands = 0 : i64, tpu.core_type = #tpu.core_type<tc>, window_params = [{transform_indices = @transform_0, window_bounds = array<i64: 8, 256>}, {transform_indices = @transform_1, window_bounds = array<i64: 8, 256>}]} {
    %c0 = arith.constant 0 : index
    %c0_0 = arith.constant 0 : index
    %0 = vector.load %arg1[%c0, %c0_0] : memref<8x256xf32, #tpu.memory_space<vmem>>, vector<8x256xf32>
    %c0_1 = arith.constant 0 : index
    %c0_2 = arith.constant 0 : index
    %1 = vector.load %arg2[%c0_1, %c0_2] : memref<8x256xf32, #tpu.memory_space<vmem>>, vector<8x256xf32>
    tpu.vector_store %arg2[%c0_1, %c0_2], %0 {strides = array<i32>} : memref<8x256xf32, #tpu.memory_space<vmem>>, vector<8x256xf32>,
    return
  }
  func.func @transform_0(%arg0: i32) -> (i32, i32) {
    %c0_i32 = arith.constant 0 : i32
    %c0_i32_0 = arith.constant 0 : i32
    return %arg0, %c0_i32 : i32, i32
  }
  func.func @transform_1(%arg0: i32) -> (i32, i32) {
    %c0_i32 = arith.constant 0 : i32
    %c0_i32_0 = arith.constant 0 : i32
    return %arg0, %c0_i32 : i32, i32
  }
}

</mosaic_0001>

<llo_original>
// kernel: tpu_custom_call.1
$region0: #{tpu_custom_call.1}
  #allocation0 [shape = 'u32[]', space=smem, size = 0x4, offset = 0x4, fixed_abs, tag = 'smem constant byte address 0x4 - core index']
  #allocation1 [shape = 'u32[72,128]{1,0:T(1,128)}', space=vmem, size = 0x9000, scoped, tag = 'internal scratch']
  %s0 = inlined_call_operand.hbm [shape: f32[8,256], index: 0, kind: input, shape index: {}, may-alias: {0,1}]
  %s1 = inlined_call_operand.hbm [shape: f32[8,256], index: 1, kind: output, shape index: {}, may-alias: {0,1}]
  %s2 = sld [smem:[#allocation0]]
  $region18: #{tpu_custom_call.1} parent=0
    _
  %s4 = ssub.s32 1, %s2
  %s5 = scalar_select 0, %s4, %s2
  $region1: #{tpu_custom_call.1} parent=0
    #allocation2 [shape = 'u8[8192]{0}', space=vmem, size = 0x2000, scoped, tag = 'input window, operand 0, single buffered']
    #allocation3 [shape = 's32[1]{0}', space=sflag, size = 0x4, scoped, tag = 'scoped memory for tpu_custom_call.1']
    #allocation4 [shape = 's32[1]{0}', space=sflag, size = 0x4, scoped, tag = 'scoped memory for tpu_custom_call.1']
    #allocation5 [shape = 'u8[8192]{0}', space=vmem, size = 0x2000, scoped, tag = 'output window, operand 0, single buffered']
    %6 = vsyncpa [#allocation3], 0
    %7 = vsyncpa [#allocation4], 0
    // Predicated region
    $region2: #{tpu_custom_call.1} parent=1 // pred_check
      _
    $region3: #{tpu_custom_call.1} parent=1 // pred_check_branch
      %9 = sbr.rel (0) target = $region5
    $region4: #{tpu_custom_call.1} parent=1 // pred_region
      %11 = vsyncadd [#allocation3], 0
      %s13 = sshll.u32 %s0, 4
      %s14 = int_to_ptr.hbm [resolvable:$true] %s13
      %s15 = sshll.u32 [#allocation2], 4
      %s16 = int_to_ptr.vmem [resolvable:$true] %s15
      %18 = dma.hbm_to_vmem [thread:$0]  %s14, 256, %s16, [#allocation3]
    $region5: #{tpu_custom_call.1} parent=1 // pred_fallthru
      _
    // Predicated region
    $region6: #{tpu_custom_call.1} parent=1 // pred_check
      _
    $region7: #{tpu_custom_call.1} parent=1 // pred_check_branch
      %20 = sbr.rel (0) target = $region9
    $region8: #{tpu_custom_call.1} parent=1 // pred_region
      %22 = dma.done [#allocation3], 256
    $region9: #{tpu_custom_call.1} parent=1 // pred_fallthru
      _
    %v23 = vld [vmem:[#allocation2] sm:$0xff]
    %v24 = vld [vmem:[#allocation2 + $0x8] sm:$0xff]
    %25 = vst [vmem:[#allocation5] sm:$0xff] %v23
    %26 = vst [vmem:[#allocation5 + $0x8] sm:$0xff] %v24
    // Predicated region
    $region10: #{tpu_custom_call.1} parent=1 // pred_check
      _
    $region11: #{tpu_custom_call.1} parent=1 // pred_check_branch
      %28 = sbr.rel (0) target = $region13
    $region12: #{tpu_custom_call.1} parent=1 // pred_region
      %30 = vsyncadd [#allocation4], 0
      %s32 = sshll.u32 [#allocation5], 4
      %s33 = int_to_ptr.vmem [resolvable:$true] %s32
      %s34 = sshll.u32 %s1, 4
      %s35 = int_to_ptr.hbm [resolvable:$true] %s34
      %37 = dma.vmem_to_hbm [thread:$0]  %s33, 256, %s35, [#allocation4]
    $region13: #{tpu_custom_call.1} parent=1 // pred_fallthru
      _
    // Predicated region
    $region14: #{tpu_custom_call.1} parent=1 // pred_check
      _
    $region15: #{tpu_custom_call.1} parent=1 // pred_check_branch
      %39 = sbr.rel (0) target = $region17
    $region16: #{tpu_custom_call.1} parent=1 // pred_region
      %41 = dma.done [#allocation4], 256
    $region17: #{tpu_custom_call.1} parent=1 // pred_fallthru
      _
    %42 = vsyncpa [#allocation3], 1
    %43 = vsyncpa [#allocation4], 1

</llo_original>
